<compile_context>
chip_gen: v6e
topology: v6e:2x2x1
jax: 0.10.0
libtpu: 0.0.40
codegen_flags: <defaults>
</compile_context>

<pallas_src>
import functools

import jax
import jax.numpy as jnp
from jax.experimental import pallas as pl
from jax.experimental.pallas import tpu as pltpu


def _round_up(x, m):
    return ((x + m - 1) // m) * m


def _label_smoothing_kernel(pred_ref, tgt_ref, w_ref, out_ref, *,
                            classes, smoothing, n_total, block_rows):
    i = pl.program_id(0)

    confidence = jnp.float32(1.0 - smoothing)
    off_value = jnp.float32(smoothing / (classes - 1))

    x = pred_ref[...].astype(jnp.float32)              # (TM, C), f32 compute
    w = w_ref[...]                                     # (1, C)
    tm, c = x.shape

    # log_softmax over the class (lane) axis.  The logical last dim is C, so
    # Mosaic masks the physical lane padding in the reductions — no explicit
    # class-column mask is needed.
    m = jnp.max(x, axis=-1, keepdims=True)
    lse = m + jnp.log(jnp.sum(jnp.exp(x - m), axis=-1, keepdims=True))
    wlogp = w * (x - lse)                              # (TM, C)

    # Fused smoothed one-hot contraction: one lane reduction per row.
    #   sum_c true_dist*(w*logp) = sum_c [off + (conf-off)*[c==tgt]]*(w*logp)
    col = jax.lax.broadcasted_iota(jnp.int32, (tm, c), 1)
    coeff = jnp.where(col == tgt_ref[...], confidence, off_value)
    row_loss = -jnp.sum(coeff * wlogp, axis=-1, keepdims=True)   # (TM, 1)

    # Mask rows past n_total (partial last batch block).  Garbage rows may
    # produce NaN/Inf, but select is NaN-safe, so they never reach the sum.
    row = jax.lax.broadcasted_iota(jnp.int32, (tm, 1), 0)
    valid = (i * block_rows + row) < n_total
    block_sum = jnp.sum(jnp.where(valid, row_loss, 0.0))

    # Per-block partial sum, written to a lane-dense (8,128)-aligned block
    # (unmasked vst).  Wrapper reads [i, 0, 0].
    out_ref[...] = jnp.full(out_ref.shape, block_sum, dtype=jnp.float32)


def label_smoothing_loss(pred, target, *, classes=7, smoothing=0.1,
                         weight=None, block_rows=4096):
    """Pallas equivalent of LabelSmoothingLoss(classes, smoothing, weight)."""
    assert classes > 1, "label smoothing needs at least 2 classes"
    n, c = pred.shape
    assert c == classes

    # Batch tile: full array for a single block, else sublane-aligned rows.
    if n <= block_rows:
        tm = n
    else:
        tm = _round_up(block_rows, 8)
    num_blocks = pl.cdiv(n, tm)

    tgt2d = target.astype(jnp.int32).reshape(n, 1)
    w = (jnp.ones((classes,), jnp.float32) if weight is None
         else weight.astype(jnp.float32).reshape(classes))
    w2d = w.reshape(1, classes)

    kernel = functools.partial(_label_smoothing_kernel, classes=classes,
                               smoothing=float(smoothing), n_total=n,
                               block_rows=tm)

    partials = pl.pallas_call(
        kernel,
        out_shape=jax.ShapeDtypeStruct((num_blocks, 8, 128), jnp.float32),
        grid=(num_blocks,),
        in_specs=[
            pl.BlockSpec((tm, c), lambda i: (i, 0)),    # logits (no padding)
            pl.BlockSpec((tm, 1), lambda i: (i, 0)),    # targets
            pl.BlockSpec((1, c), lambda i: (0, 0)),     # class weights
        ],
        out_specs=pl.BlockSpec((1, 8, 128), lambda i: (i, 0, 0)),
        compiler_params=pltpu.CompilerParams(
            # Independent per-block partials -> batch axis can be sharded
            # across TensorCores on v7x (no-op on v5e/v6e).
            dimension_semantics=("parallel",),
            vmem_limit_bytes=64 * 1024 * 1024,
        ),
    )(pred, tgt2d, w2d)

    return jnp.sum(partials[:, 0, 0]) / jnp.float32(n)


def _reference(pred, target, *, classes=7, smoothing=0.1, weight=None):
    confidence = 1.0 - smoothing
    logp = jax.nn.log_softmax(pred.astype(jnp.float32), axis=-1)
    if weight is not None:
        logp = logp * weight.astype(jnp.float32).reshape(1, -1)
    true_dist = jnp.full_like(logp, smoothing / (classes - 1))
    true_dist = true_dist.at[jnp.arange(pred.shape[0]), target].set(confidence)
    return jnp.mean(jnp.sum(-true_dist * logp, axis=-1))


if __name__ == "__main__":
    key = jax.random.PRNGKey(0)
    k_pred, k_tgt, k_w = jax.random.split(key, 3)

    batch, classes = 13, 7
    pred = jax.random.normal(k_pred, (batch, classes), dtype=jnp.float32)
    target = jax.random.randint(k_tgt, (batch,), 0, classes, dtype=jnp.int32)
    weight = jax.random.uniform(k_w, (classes,), jnp.float32, 0.5, 1.5)

    # 1) multi-block grid with a partial last block, no per-class weight.
    loss = label_smoothing_loss(pred, target, classes=classes, smoothing=0.1,
                                block_rows=8)
    loss = jax.block_until_ready(loss)
    ref = _reference(pred, target, classes=classes, smoothing=0.1)
    assert jnp.allclose(loss, ref, atol=1e-5, rtol=1e-5), (loss, ref)

    # 2) same, with per-class weight (module's `weight is not None` branch).
    loss_w = label_smoothing_loss(pred, target, classes=classes, smoothing=0.1,
                                  weight=weight, block_rows=8)
    loss_w = jax.block_until_ready(loss_w)
    ref_w = _reference(pred, target, classes=classes, smoothing=0.1,
                       weight=weight)
    assert jnp.allclose(loss_w, ref_w, atol=1e-5, rtol=1e-5), (loss_w, ref_w)

    # 3) default (large) block_rows -> single full-array block.
    loss_1b = label_smoothing_loss(pred, target, classes=classes,
                                   smoothing=0.1, weight=weight)
    loss_1b = jax.block_until_ready(loss_1b)
    assert jnp.allclose(loss_1b, ref_w, atol=1e-5, rtol=1e-5), (loss_1b, ref_w)

    print("KERNEL_OK")
</pallas_src>

<mosaic_0001>
module attributes {stable_mosaic.version = 11 : i64} {
  func.func @_label_smoothing_kernel(%arg0: i32, %arg1: memref<8x7xf32, #tpu.memory_space<vmem>>, %arg2: memref<8x1xi32, #tpu.memory_space<vmem>>, %arg3: memref<1x7xf32, #tpu.memory_space<vmem>>, %arg4: memref<1x8x128xf32, #tpu.memory_space<vmem>>) attributes {dimension_semantics = [#tpu.dimension_semantics<parallel>], iteration_bounds = array<i64: 2>, scalar_prefetch = 0 : i64, scratch_operands = 0 : i64, tpu.core_type = #tpu.core_type<tc>, window_params = [{transform_indices = @transform_0, window_bounds = array<i64: 8, 7>}, {transform_indices = @transform_1, window_bounds = array<i64: 8, 1>}, {pipeline_mode = #tpu.pipeline_mode<synchronous>, transform_indices = @transform_2, window_bounds = array<i64: 1, 7>}, {transform_indices = @transform_3, window_bounds = array<i64: 1, 8, 128>}]} {
    %c0 = arith.constant 0 : index
    %c0_0 = arith.constant 0 : index
    %0 = vector.load %arg1[%c0, %c0_0] : memref<8x7xf32, #tpu.memory_space<vmem>>, vector<8x7xf32>
    %c0_1 = arith.constant 0 : index
    %c0_2 = arith.constant 0 : index
    %1 = vector.load %arg3[%c0_1, %c0_2] : memref<1x7xf32, #tpu.memory_space<vmem>>, vector<1x7xf32>
    %cst = arith.constant dense<0xFF800000> : vector<8xf32>
    %2 = vector.multi_reduction <maximumf>, %0, %cst [1] : vector<8x7xf32> to vector<8xf32>
    %3 = vector.shape_cast %2 : vector<8xf32> to vector<8x1xf32>
    %4 = vector.broadcast %3 : vector<8x1xf32> to vector<8x7xf32>
    %5 = arith.subf %0, %4 : vector<8x7xf32>
    %6 = math.exp %5 : vector<8x7xf32>
    %cst_3 = arith.constant dense<0.000000e+00> : vector<8xf32>
    %7 = vector.multi_reduction <add>, %6, %cst_3 [1] : vector<8x7xf32> to vector<8xf32>
    %8 = vector.shape_cast %7 : vector<8xf32> to vector<8x1xf32>
    %9 = math.log %8 : vector<8x1xf32>
    %10 = arith.addf %3, %9 : vector<8x1xf32>
    %11 = vector.broadcast %10 : vector<8x1xf32> to vector<8x7xf32>
    %12 = arith.subf %0, %11 : vector<8x7xf32>
    %13 = vector.broadcast %1 : vector<1x7xf32> to vector<8x7xf32>
    %14 = arith.mulf %13, %12 : vector<8x7xf32>
    %15 = tpu.iota {dimensions = array<i32: 1>} : vector<8x7xi32>
    %c0_4 = arith.constant 0 : index
    %c0_5 = arith.constant 0 : index
    %16 = vector.load %arg2[%c0_4, %c0_5] : memref<8x1xi32, #tpu.memory_space<vmem>>, vector<8x1xi32>
    %17 = vector.broadcast %16 : vector<8x1xi32> to vector<8x7xi32>
    %18 = arith.cmpi eq, %15, %17 : vector<8x7xi32>
    %cst_6 = arith.constant 0.899999976 : f32
    %cst_7 = arith.constant 0.0166666675 : f32
    %19 = vector.broadcast %cst_6 : f32 to vector<8x7xf32>
    %20 = vector.broadcast %cst_7 : f32 to vector<8x7xf32>
    %21 = arith.select %18, %19, %20 : vector<8x7xi1>, vector<8x7xf32>
    %22 = arith.mulf %21, %14 : vector<8x7xf32>
    %cst_8 = arith.constant dense<0.000000e+00> : vector<8xf32>
    %23 = vector.multi_reduction <add>, %22, %cst_8 [1] : vector<8x7xf32> to vector<8xf32>
    %24 = vector.shape_cast %23 : vector<8xf32> to vector<8x1xf32>
    %cst_9 = arith.constant 0.000000e+00 : f32
    %25 = vector.broadcast %cst_9 : f32 to vector<8x1xf32>
    %26 = arith.subf %25, %24 : vector<8x1xf32>
    %27 = tpu.iota {dimensions = array<i32: 0>} : vector<8x1xi32>
    %c8_i32 = arith.constant 8 : i32
    %28 = arith.muli %arg0, %c8_i32 : i32
    %29 = vector.broadcast %28 : i32 to vector<8x1xi32>
    %30 = arith.addi %29, %27 : vector<8x1xi32>
    %c13_i32 = arith.constant 13 : i32
    %31 = vector.broadcast %c13_i32 : i32 to vector<8x1xi32>
    %32 = arith.cmpi slt, %30, %31 : vector<8x1xi32>
    %cst_10 = arith.constant 0.000000e+00 : f32
    %33 = vector.broadcast %cst_10 : f32 to vector<8x1xf32>
    %34 = arith.select %32, %26, %33 : vector<8x1xi1>, vector<8x1xf32>
    %35 = vector.shape_cast %34 : vector<8x1xf32> to vector<1x8x1xf32>
    %cst_11 = arith.constant dense<0.000000e+00> : vector<1xf32>
    %36 = vector.multi_reduction <add>, %35, %cst_11 [1, 2] : vector<1x8x1xf32> to vector<1xf32>
    %37 = vector.shape_cast %36 : vector<1xf32> to vector<1x1x1xf32>
    %38 = vector.extract %37[0, 0, 0] : f32 from vector<1x1x1xf32>
    %39 = vector.broadcast %38 : f32 to vector<1x8x128xf32>
    %c0_12 = arith.constant 0 : index
    %c0_13 = arith.constant 0 : index
    %c0_14 = arith.constant 0 : index
    %40 = vector.load %arg4[%c0_12, %c0_13, %c0_14] : memref<1x8x128xf32, #tpu.memory_space<vmem>>, vector<1x8x128xf32>
    tpu.vector_store %arg4[%c0_12, %c0_13, %c0_14], %39 {strides = array<i32>} : memref<1x8x128xf32, #tpu.memory_space<vmem>>, vector<1x8x128xf32>,
    return
  }
  func.func @transform_0(%arg0: i32) -> (i32, i32) {
    %c0_i32 = arith.constant 0 : i32
    %c0_i32_0 = arith.constant 0 : i32
    return %arg0, %c0_i32 : i32, i32
  }
  func.func @transform_1(%arg0: i32) -> (i32, i32) {
    %c0_i32 = arith.constant 0 : i32
    %c0_i32_0 = arith.constant 0 : i32
    return %arg0, %c0_i32 : i32, i32
  }
  func.func @transform_2(%arg0: i32) -> (i32, i32) {
    %c0_i32 = arith.constant 0 : i32
    %c0_i32_0 = arith.constant 0 : i32
    %c0_i32_1 = arith.constant 0 : i32
    return %c0_i32, %c0_i32_0 : i32, i32
  }
  func.func @transform_3(%arg0: i32) -> (i32, i32, i32) {
    %c0_i32 = arith.constant 0 : i32
    %c0_i32_0 = arith.constant 0 : i32
    %c0_i32_1 = arith.constant 0 : i32
    return %arg0, %c0_i32, %c0_i32_0 : i32, i32, i32
  }
}

</mosaic_0001>

<llo_original>
// kernel: tpu_custom_call.1
$region0: #{tpu_custom_call.1}
  #allocation0 [shape = 'u32[]', space=smem, size = 0x4, offset = 0x4, fixed_abs, tag = 'smem constant byte address 0x4 - core index']
  #allocation1 [shape = 'u32[144,128]{1,0:T(1,128)}', space=vmem, size = 0x12000, scoped, tag = 'internal scratch']
  %s0 = inlined_call_operand.vmem [shape: f32[13,7], index: 0, kind: input, shape index: {}]
  %s1 = inlined_call_operand.vmem [shape: s32[13,1], index: 1, kind: input, shape index: {}]
  %s2 = inlined_call_operand.vmem [shape: f32[1,7], index: 2, kind: input, shape index: {}]
  %s3 = inlined_call_operand.hbm [shape: f32[2,8,128], index: 3, kind: output, shape index: {}]
  %s4 = sld [smem:[#allocation0]]
  $region45: #{tpu_custom_call.1} parent=0
    _
  %s6 = ssub.s32 1, %s4
  %s7 = scalar_select 0, %s6, %s4
  $region1: #{tpu_custom_call.1} parent=0
    #allocation2 [shape = 'u8[8192]{0}', space=vmem, size = 0x2000, scoped, tag = 'output window, operand 0']
    #allocation3 [shape = 's32[2]{0}', space=sflag, size = 0x8, scoped, tag = 'scoped memory for tpu_custom_call.1']
    %8 = vsyncpa [#allocation3], 0
    %s9 = scalar_lea.sflag [#allocation3], 1
    %10 = vsyncpa %s9, 0
    loop: start=0, step=1, limit=4
    $region2: #{tpu_custom_call.1} parent=1 // loop_pre_header
      _
    $region3: #{tpu_custom_call.1} parent=1 // loop_header
      %s12 = sphi 0, %s16
      %p13 = scmp.ge.s32.totalorder %s12, 4
      %s22 = sphi 0, %s24
      %s25 = sphi 0, %s22
      %s26 = sphi 0, %s25
      %s42 = sphi 0, %s26
      %s48 = sphi 0, %s50
      %s51 = sphi 0, %s48
      %s52 = sphi 0, %s51
      %s68 = sphi 0, %s52
      %s72 = sphi 0, %s72
      %s74 = sphi 0, %s72
      %s75 = sphi 0, %s74
      %s89 = sphi 0, %s75
      %s95 = sphi 0, %s97
      %s98 = sphi 0, %s95
      %s99 = sphi 0, %s98
      %s115 = sphi 0, %s99
    $region4: #{tpu_custom_call.1} parent=1 // loop_header_branch
      %15 = sbr.rel (%p13) target = $region8
    $region5: #{tpu_custom_call.1} parent=1 // loop_body
      %s17 = ssub.s32 %s12, 1
      %s18 = ssub.s32 %s12, 2
      %s19 = sadd.s32 %s12, 1
      %s20 = ssub.s32 %s12, %s19
      %p21 = scmp.eq.s32.totalorder %s20, 0
      %s23 = sadd.s32 %s22, 1
      %s24 = scalar_select %p21, %s22, %s23
      %p27 = pneg %p21
      %p28 = scmp.eq.s32.totalorder %s12, 1
      %p29 = por %p27, %p28
      %p30 = scmp.ne.s32.totalorder %s22, %s25
      %p31 = scmp.eq.s32.totalorder %s12, 0
      %p32 = por %p30, %p31
      %p33 = scmp.ne.s32.totalorder %s22, %s25
      %p34 = scmp.eq.s32.totalorder %s17, 1
      %p35 = por %p33, %p34
      %p36 = scmp.ne.s32.totalorder %s25, %s26
      %p37 = scmp.eq.s32.totalorder %s17, 0
      %p38 = por %p36, %p37
      %p39 = scmp.ne.s32.totalorder %s25, %s26
      %p40 = scmp.eq.s32.totalorder %s18, 1
      %p41 = por %p39, %p40
      %p43 = scmp.ne.s32.totalorder %s26, %s42
      %p44 = scmp.eq.s32.totalorder %s18, 0
      %p45 = por %p43, %p44
      %s46 = ssub.s32 %s12, %s19
      %p47 = scmp.eq.s32.totalorder %s46, 0
      %s49 = sadd.s32 %s48, 1
      %s50 = scalar_select %p47, %s48, %s49
      %p53 = pneg %p47
      %p54 = scmp.eq.s32.totalorder %s12, 1
      %p55 = por %p53, %p54
      %p56 = scmp.ne.s32.totalorder %s48, %s51
      %p57 = scmp.eq.s32.totalorder %s12, 0
      %p58 = por %p56, %p57
      %p59 = scmp.ne.s32.totalorder %s48, %s51
      %p60 = scmp.eq.s32.totalorder %s17, 1
      %p61 = por %p59, %p60
      %p62 = scmp.ne.s32.totalorder %s51, %s52
      %p63 = scmp.eq.s32.totalorder %s17, 0
      %p64 = por %p62, %p63
      %p65 = scmp.ne.s32.totalorder %s51, %s52
      %p66 = scmp.eq.s32.totalorder %s18, 1
      %p67 = por %p65, %p66
      %p69 = scmp.ne.s32.totalorder %s52, %s68
      %p70 = scmp.eq.s32.totalorder %s18, 0
      %p71 = por %p69, %p70
      %s73 = sadd.s32 %s72, 1
      %p76 = scmp.eq.s32.totalorder %s12, 1
      %p77 = scmp.ne.s32.totalorder %s72, %s74
      %p78 = scmp.eq.s32.totalorder %s12, 0
      %p79 = por %p77, %p78
      %p80 = scmp.ne.s32.totalorder %s72, %s74
      %p81 = scmp.eq.s32.totalorder %s17, 1
      %p82 = por %p80, %p81
      %p83 = scmp.ne.s32.totalorder %s74, %s75
      %p84 = scmp.eq.s32.totalorder %s17, 0
      %p85 = por %p83, %p84
      %p86 = scmp.ne.s32.totalorder %s74, %s75
      %p87 = scmp.eq.s32.totalorder %s18, 1
      %p88 = por %p86, %p87
      %p90 = scmp.ne.s32.totalorder %s75, %s89
      %p91 = scmp.eq.s32.totalorder %s18, 0
      %p92 = por %p90, %p91
      %s93 = ssub.s32 %s12, %s19
      %p94 = scmp.eq.s32.totalorder %s93, 0
      %s96 = sadd.s32 %s95, 1
      %s97 = scalar_select %p94, %s95, %s96
      %p100 = pneg %p94
      %p101 = scmp.eq.s32.totalorder %s12, 1
      %p102 = por %p100, %p101
      %p103 = scmp.ne.s32.totalorder %s95, %s98
      %p104 = scmp.eq.s32.totalorder %s12, 0
      %p105 = por %p103, %p104
      %p106 = scmp.ne.s32.totalorder %s95, %s98
      %p107 = scmp.eq.s32.totalorder %s17, 1
      %p108 = por %p106, %p107
      %p109 = scmp.ne.s32.totalorder %s98, %s99
      %p110 = scmp.eq.s32.totalorder %s17, 0
      %p111 = por %p109, %p110
      %p112 = scmp.ne.s32.totalorder %s98, %s99
      %p113 = scmp.eq.s32.totalorder %s18, 1
      %p114 = por %p112, %p113
      %p116 = scmp.ne.s32.totalorder %s99, %s115
      %p117 = scmp.eq.s32.totalorder %s18, 0
      %p118 = por %p116, %p117
      %p119 = scmp.le.s32.totalorder 1, %s12
      %p120 = scmp.lt.s32.totalorder %s12, 3
      %p121 = pnand %p119, %p120
      %p122 = pneg %p121
      // Predicated region
      $region9: #{tpu_custom_call.1} parent=5 // pred_check
        _
      $region10: #{tpu_custom_call.1} parent=5 // pred_check_branch
        %124 = sbr.rel (%p121) target = $region12
      $region11: #{tpu_custom_call.1} parent=5 // pred_region
        %s125 = ssub.s32 %s12, 1
        // Predicated region
        $region13: #{tpu_custom_call.1} parent=11 // pred_check
          %p126 = pneg %p85
        $region14: #{tpu_custom_call.1} parent=11 // pred_check_branch
          %128 = sbr.rel (%p126) target = $region16
        $region15: #{tpu_custom_call.1} parent=11 // pred_region
          _
        $region16: #{tpu_custom_call.1} parent=11 // pred_fallthru
          _
      $region12: #{tpu_custom_call.1} parent=5 // pred_fallthru
        _
      %p129 = scmp.lt.s32.totalorder %s12, 2
      // Predicated region
      $region17: #{tpu_custom_call.1} parent=5 // pred_check
        %p130 = pneg %p129
      $region18: #{tpu_custom_call.1} parent=5 // pred_check_branch
        %132 = sbr.rel (%p130) target = $region20
      $region19: #{tpu_custom_call.1} parent=5 // pred_region
        // Predicated region
        $region21: #{tpu_custom_call.1} parent=19 // pred_check
          %p133 = pneg %p32
        $region22: #{tpu_custom_call.1} parent=19 // pred_check_branch
          %135 = sbr.rel (%p133) target = $region24
        $region23: #{tpu_custom_call.1} parent=19 // pred_region
          %p136 = scmp.lt.s32.totalorder %s12, 1
          %s137 = scalar_select %p136, %s12, 1
          %s138 = smul.addr %s137, 8
          %s139 = scalar_lea.vmem %s0, %s138
        $region24: #{tpu_custom_call.1} parent=19 // pred_fallthru
          _
        // Predicated region
        $region25: #{tpu_custom_call.1} parent=19 // pred_check
          %p140 = pneg %p58
        $region26: #{tpu_custom_call.1} parent=19 // pred_check_branch
          %142 = sbr.rel (%p140) target = $region28
        $region27: #{tpu_custom_call.1} parent=19 // pred_region
          %p143 = scmp.lt.s32.totalorder %s12, 1
          %s144 = scalar_select %p143, %s12, 1
          %s145 = smul.addr %s144, 8
          %s146 = scalar_lea.vmem %s1, %s145
        $region28: #{tpu_custom_call.1} parent=19 // pred_fallthru
          _
      $region20: #{tpu_custom_call.1} parent=5 // pred_fallthru
        _
      %p147 = scmp.le.s32.totalorder 1, %s12
      %p148 = scmp.lt.s32.totalorder %s12, 3
      %p149 = pnand %p147, %p148
      %p150 = pneg %p149
      // Predicated region
      $region29: #{tpu_custom_call.1} parent=5 // pred_check
        _
      $region30: #{tpu_custom_call.1} parent=5 // pred_check_branch
        %152 = sbr.rel (%p149) target = $region32
      $region31: #{tpu_custom_call.1} parent=5 // pred_region
        %s153 = ssub.s32 %s12, 1
        %p154 = scmp.lt.s32.totalorder %s17, 1
        %s155 = scalar_select %p154, %s17, 1
        %s156 = smul.addr %s155, 8
        %s157 = scalar_lea.vmem %s0, %s156
        %p158 = pneg %p38
        %p159 = pneg %p35
        %p160 = scmp.lt.s32.totalorder %s17, 1
        %s161 = scalar_select %p160, %s17, 1
        %s162 = smul.addr %s161, 8
        %s163 = scalar_lea.vmem %s1, %s162
        %p164 = pneg %p64
        %p165 = pneg %p61
        %p166 = pneg %p85
        %p167 = pneg %p82
        %p168 = pneg %p111
        %p169 = pneg %p108
        %s170 = sand.u32 %s98, 1
        %s171 = scalar_lea.sflag [#allocation3], %s170
        %s172 = sand.u32 %s98, 1
        %s173 = smul.addr %s172, 8
        %s174 = scalar_lea.vmem [#allocation2], %s173
        %p175 = scmp.lt.s32.totalorder %s17, 1
        %s176 = scalar_select %p175, %s17, 1
        %s177 = smul.addr %s176, 8
        %s178 = scalar_lea.vmem %s0, %s177
        %p179 = scmp.lt.s32.totalorder %s17, 1
        %s180 = scalar_select %p179, %s17, 1
        %s181 = smul.addr %s180, 8
        %s182 = scalar_lea.vmem %s1, %s181
        %v183 = vld [vmem:[%s178] sm:$0xff]
        %v184 = vld [vmem:[%s2] sm:$0x1]
        %vm185 = vcmask 56320
        %v186 = vsel %vm185, %v183, -inf
        %187 = vmax.xlane.f32.xlu0 %v186
        %v188 = vpop.xlane.xlu0 %187
        %v189 = vsub.f32 %v183, %v188
        %v190 = vmul.f32 %v189, 1.442695
        %v191 = vpow.pop %v190
        %v192 = vsel %vm185, %v191, 0.0
        %193 = vadd.xlane.f32.xlu0 %v192
        %v194 = vpop.xlane.xlu0 %193
        %v195 = vlog2.pop %v194
        %v196 = vmul.f32 %v195, 0.6931472
        %v197 = vadd.f32 %v188, %v196
        %v198 = vsub.f32 %v183, %v197
        %v200 = vlaneseq
        %v201 = vshrl.u32 %v200, 7
        %v202 = vsub.s32 0, %v201
        %v203 = vrot.slane %v184, %v202
        %v205 = vmul.f32 %v203, %v198
        %v206 = vlaneseq
        %v207 = vand.u32 %v206, 127
        %v208 = vld [vmem:[%s182] sm:$0xff]
        %209 = vset.pattern.permute.xlu0 0
        %210 = vperm.xlu0 %209, %v208
        %v211 = vpop.permute.xlu0 %210
        %vm212 = vcmp.eq.s32.totalorder %v207, %v211
        %v213 = vsel %vm212, 0.9, 0.016666668
        %v214 = vmul.f32 %v213, %v205
        %v215 = vsel %vm185, %v214, 0.0
        %216 = vadd.xlane.f32.xlu0 %v215
        %v217 = vpop.xlane.xlu0 %216
        %v218 = vsub.f32 0.0, %v217
        %v219 = vlaneseq
        %v220 = vshrl.u32 %v219, 7
        %s221 = smul.u32 %s17, 8
        %v222 = vstv %s221
        %v223 = vadd.s32 %v222, %v220
        %vm224 = vcmp.lt.s32.totalorder %v223, 13
        %v225 = vsel %vm224, %v218, 0.0
        %vm226 = vcmask 7168
        %v227 = vsel %vm226, %v225, 0.0
        %228 = vadd.xlane.f32.xlu0 %v227
        %v229 = vpop.xlane.xlu0 %228
        %v230 = vrot.slane %v229, 4
        %v231 = vadd.f32 %v229, %v230
        %v232 = vrot.slane %v231, 2
        %v233 = vadd.f32 %v231, %v232
        %v234 = vrot.slane %v233, 1
        %v235 = vadd.f32 %v233, %v234
        %s236 = vtos %v235
        %v237 = vstv %s236
        %238 = vst [vmem:[%s174] sm:$0xff] %v237
        %s239 = sand.u32 %s98, 1
        %s240 = scalar_lea.sflag [#allocation3], %s239
        %s241 = sand.u32 %s98, 1
        %s242 = smul.addr %s241, 8
        %s243 = scalar_lea.vmem [#allocation2], %s242
        // Predicated region
        $region33: #{tpu_custom_call.1} parent=31 // pred_check
          %p244 = pneg %p108
        $region34: #{tpu_custom_call.1} parent=31 // pred_check_branch
          %246 = sbr.rel (%p244) target = $region36
        $region35: #{tpu_custom_call.1} parent=31 // pred_region
          %s248 = ssub.s32 128, 128
          %249 = vsyncadd %s240, %s248
          %s250 = smul.addr %s17, 128
          %s251 = scalar_lea.hbm %s3, %s250
          %s253 = sshll.u32 %s243, 4
          %s254 = int_to_ptr.vmem [resolvable:$true] %s253
          %256 = dma.vmem_to_hbm [thread:$0]  %s254, 128, %s251, %s240
        $region36: #{tpu_custom_call.1} parent=31 // pred_fallthru
          _
      $region32: #{tpu_custom_call.1} parent=5 // pred_fallthru
        _
      %p257 = scmp.le.s32.totalorder 2, %s12
      // Predicated region
      $region37: #{tpu_custom_call.1} parent=5 // pred_check
        %p258 = pneg %p257
      $region38: #{tpu_custom_call.1} parent=5 // pred_check_branch
        %260 = sbr.rel (%p258) target = $region40
      $region39: #{tpu_custom_call.1} parent=5 // pred_region
        %s261 = ssub.s32 %s12, 2
        // Predicated region
        $region41: #{tpu_custom_call.1} parent=39 // pred_check
          %p262 = pneg %p114
        $region42: #{tpu_custom_call.1} parent=39 // pred_check_branch
          %264 = sbr.rel (%p262) target = $region44
        $region43: #{tpu_custom_call.1} parent=39 // pred_region
          %s265 = sand.u32 %s99, 1
          %s266 = scalar_lea.sflag [#allocation3], %s265
          %s267 = sand.u32 %s99, 1
          %s268 = smul.addr %s267, 8
          %s269 = scalar_lea.vmem [#allocation2], %s268
          %270 = dma.done %s266, 128
        $region44: #{tpu_custom_call.1} parent=39 // pred_fallthru
          _
      $region40: #{tpu_custom_call.1} parent=5 // pred_fallthru
        _
    $region6: #{tpu_custom_call.1} parent=1 // loop_footer
      %s16 = sadd.s32 1, %s12
    $region7: #{tpu_custom_call.1} parent=1 // loop_footer_branch
      %11 = sbr.rel target = $region3
    $region8: #{tpu_custom_call.1} parent=1 // loop_exit
      _
    %271 = vsyncpa [#allocation3], 1
    %s272 = scalar_lea.sflag [#allocation3], 1
    %273 = vsyncpa %s272, 1

</llo_original>
